<compile_context>
chip_gen: v7x
topology: tpu7x:2x2x1
jax: 0.10.0
libtpu: 0.0.40
codegen_flags: <defaults>
</compile_context>

<pallas_src>
import jax
import jax.numpy as jnp
from jax.experimental import pallas as pl
from jax.experimental.pallas import tpu as pltpu


def _identity_kernel(x_ref, o_ref):
    # Pure pass-through: copy the current VMEM tile to the output tile.
    o_ref[...] = x_ref[...]


# Widest lane (last-dim) candidates, all multiples of 128.
_LANE_CANDIDATES = (8192, 4096, 2048, 1024, 512, 256, 128)
# ~2 MiB tiles: double-buffered in+out ≈ 8 MiB VMEM — safe on v5e/v6e/v7x
# default scoped VMEM limits without raising vmem_limit_bytes.
_TARGET_TILE_BYTES = 2 * 1024 * 1024


def _copy_2d(x2d: jax.Array) -> jax.Array:
    """Tiled identity copy of a 2-D (rows, lane) array, lane % 128 == 0."""
    rows, lane = x2d.shape
    itemsize = jnp.dtype(x2d.dtype).itemsize
    # Sublane packing: 8 rows for 32-bit, 16 for 16-bit, 32 for 8-bit dtypes.
    sub_mult = max(8, 32 // itemsize)

    target_rows = max(1, _TARGET_TILE_BYTES // (lane * itemsize))
    if rows <= target_rows:
        # Single grid step; a full-extent block is always a legal block shape.
        tile_rows = rows
    else:
        tile_rows = max(sub_mult, (target_rows // sub_mult) * sub_mult)

    grid = (pl.cdiv(rows, tile_rows),)
    return pl.pallas_call(
        _identity_kernel,
        out_shape=jax.ShapeDtypeStruct((rows, lane), x2d.dtype),
        grid_spec=pltpu.PrefetchScalarGridSpec(
            num_scalar_prefetch=0,
            grid=grid,
            in_specs=[pl.BlockSpec((tile_rows, lane), lambda i: (i, 0))],
            out_specs=pl.BlockSpec((tile_rows, lane), lambda i: (i, 0)),
        ),
        compiler_params=pltpu.CompilerParams(
            # Lets the grid shard across v7x's 2 TensorCores; harmless on v5e/v6e.
            dimension_semantics=("parallel",),
        ),
    )(x2d)


def identity_pallas(x: jax.Array) -> jax.Array:
    """Identity forward pass via a Pallas TPU copy kernel.

    Accepts any-rank input (the PyTorch Identity is shape-agnostic); returns an
    array with identical shape, dtype, and values.
    """
    orig_shape = x.shape
    n = x.size
    if n == 0:
        return x

    # Fast path: widest lane width (multiple of 128) that evenly divides the
    # flat size → no padding / slicing, reshapes are free views, HBM traffic
    # is exactly 1 read + 1 write.
    lane = None
    for w in _LANE_CANDIDATES:
        if n % w == 0:
            lane = w
            break

    if lane is not None:
        out2d = _copy_2d(x.reshape(n // lane, lane))
        return out2d.reshape(orig_shape)

    # Ragged fallback: a single pad to a 128-lane multiple, kernel, one slice.
    lane = 128
    n_pad = pl.cdiv(n, lane) * lane
    flat = jnp.pad(x.reshape(-1), (0, n_pad - n))
    out2d = _copy_2d(flat.reshape(n_pad // lane, lane))
    return out2d.reshape(-1)[:n].reshape(orig_shape)


if __name__ == "__main__":
    key = jax.random.PRNGKey(0)

    # Small NCHW input consistent with a backbone feature map.
    x = jax.random.normal(key, (2, 4, 16, 16), dtype=jnp.float32)
    # Identity(channel) takes a `channel` arg but has no parameters.
    y = jax.block_until_ready(identity_pallas(x))
    assert y.shape == x.shape and y.dtype == x.dtype
    assert bool(jnp.all(y == x))

    # bf16 input (exercises dtype-aware sublane tiling).
    xb = jax.random.normal(key, (2, 4, 16, 16)).astype(jnp.bfloat16)
    yb = jax.block_until_ready(identity_pallas(xb))
    assert yb.shape == xb.shape and yb.dtype == xb.dtype
    assert bool(jnp.all(yb == xb))

    # Ragged size (exercises the single-pad fallback path).
    xr = jax.random.normal(jax.random.PRNGKey(1), (3, 5, 7), dtype=jnp.float32)
    yr = jax.block_until_ready(identity_pallas(xr))
    assert yr.shape == xr.shape and yr.dtype == xr.dtype
    assert bool(jnp.all(yr == xr))

    print("KERNEL_OK")
</pallas_src>

<mosaic_0001>
module attributes {stable_mosaic.version = 11 : i64} {
  func.func @_identity_kernel(%arg0: i32, %arg1: memref<1x2048xf32, #tpu.memory_space<vmem>>, %arg2: memref<1x2048xf32, #tpu.memory_space<vmem>>) attributes {dimension_semantics = [#tpu.dimension_semantics<parallel>], iteration_bounds = array<i64: 1>, scalar_prefetch = 0 : i64, scratch_operands = 0 : i64, tpu.core_type = #tpu.core_type<tc>, window_params = [{transform_indices = @transform_0, window_bounds = array<i64: 1, 2048>}, {transform_indices = @transform_1, window_bounds = array<i64: 1, 2048>}]} {
    %c0 = arith.constant 0 : index
    %c0_0 = arith.constant 0 : index
    %0 = vector.load %arg1[%c0, %c0_0] : memref<1x2048xf32, #tpu.memory_space<vmem>>, vector<1x2048xf32>
    %c0_1 = arith.constant 0 : index
    %c0_2 = arith.constant 0 : index
    %1 = vector.load %arg2[%c0_1, %c0_2] : memref<1x2048xf32, #tpu.memory_space<vmem>>, vector<1x2048xf32>
    tpu.vector_store %arg2[%c0_1, %c0_2], %0 {strides = array<i32>} : memref<1x2048xf32, #tpu.memory_space<vmem>>, vector<1x2048xf32>,
    return
  }
  func.func @transform_0(%arg0: i32) -> (i32, i32) {
    %c0_i32 = arith.constant 0 : i32
    %c0_i32_0 = arith.constant 0 : i32
    return %arg0, %c0_i32 : i32, i32
  }
  func.func @transform_1(%arg0: i32) -> (i32, i32) {
    %c0_i32 = arith.constant 0 : i32
    %c0_i32_0 = arith.constant 0 : i32
    return %arg0, %c0_i32 : i32, i32
  }
}

</mosaic_0001>

<llo_original>
// kernel: tpu_custom_call.1
$region0: #{tpu_custom_call.1}
  #allocation0 [shape = 'u32[]', space=smem, size = 0x4, offset = 0x4, fixed_abs, tag = 'smem constant byte address 0x4 - core index']
  #allocation1 [shape = 'u32[144,128]{1,0:T(1,128)}', space=vmem, size = 0x12000, scoped, tag = 'internal scratch']
  %s0 = inlined_call_operand.hbm [shape: f32[1,2048], index: 0, kind: input, shape index: {}]
  %s1 = inlined_call_operand.hbm [shape: f32[1,2048], index: 1, kind: output, shape index: {}]
  %s2 = sld [smem:[#allocation0]]
  $region18: #{tpu_custom_call.1} parent=0
    _
  %s4 = ssub.s32 1, %s2
  %s5 = scalar_select 0, %s4, %s2
  $region1: #{tpu_custom_call.1} parent=0
    #allocation2 [shape = 'u8[8192]{0}', space=vmem, size = 0x2000, scoped, tag = 'input window, operand 0, single buffered']
    #allocation3 [shape = 's32[1]{0}', space=sflag, size = 0x4, scoped, tag = 'scoped memory for tpu_custom_call.1']
    #allocation4 [shape = 's32[1]{0}', space=sflag, size = 0x4, scoped, tag = 'scoped memory for tpu_custom_call.1']
    #allocation5 [shape = 'u8[8192]{0}', space=vmem, size = 0x2000, scoped, tag = 'output window, operand 0, single buffered']
    %6 = vsyncpa [#allocation3], 0
    %7 = vsyncpa [#allocation4], 0
    // Predicated region
    $region2: #{tpu_custom_call.1} parent=1 // pred_check
      _
    $region3: #{tpu_custom_call.1} parent=1 // pred_check_branch
      %9 = sbr.rel (0) target = $region5
    $region4: #{tpu_custom_call.1} parent=1 // pred_region
      %s11 = ssub.s32 256, 256
      %12 = vsyncadd [#allocation3], %s11
      %s14 = sshll.u32 [#allocation2], 4
      %s15 = int_to_ptr.vmem [resolvable:$true] %s14
      %17 = dma.hbm_to_vmem [thread:$0]  %s0, 256, %s15, [#allocation3]
    $region5: #{tpu_custom_call.1} parent=1 // pred_fallthru
      _
    // Predicated region
    $region6: #{tpu_custom_call.1} parent=1 // pred_check
      _
    $region7: #{tpu_custom_call.1} parent=1 // pred_check_branch
      %19 = sbr.rel (0) target = $region9
    $region8: #{tpu_custom_call.1} parent=1 // pred_region
      %20 = dma.done [#allocation3], 256
    $region9: #{tpu_custom_call.1} parent=1 // pred_fallthru
      _
    %v21 = vld [vmem:[#allocation2] sm:$0xff]
    %v22 = vld [vmem:[#allocation2 + $0x8] sm:$0xff]
    %23 = vst [vmem:[#allocation5] sm:$0xff] %v21
    %24 = vst [vmem:[#allocation5 + $0x8] sm:$0xff] %v22
    // Predicated region
    $region10: #{tpu_custom_call.1} parent=1 // pred_check
      _
    $region11: #{tpu_custom_call.1} parent=1 // pred_check_branch
      %26 = sbr.rel (0) target = $region13
    $region12: #{tpu_custom_call.1} parent=1 // pred_region
      %s28 = ssub.s32 256, 256
      %29 = vsyncadd [#allocation4], %s28
      %s31 = sshll.u32 [#allocation5], 4
      %s32 = int_to_ptr.vmem [resolvable:$true] %s31
      %34 = dma.vmem_to_hbm [thread:$0]  %s32, 256, %s1, [#allocation4]
    $region13: #{tpu_custom_call.1} parent=1 // pred_fallthru
      _
    // Predicated region
    $region14: #{tpu_custom_call.1} parent=1 // pred_check
      _
    $region15: #{tpu_custom_call.1} parent=1 // pred_check_branch
      %36 = sbr.rel (0) target = $region17
    $region16: #{tpu_custom_call.1} parent=1 // pred_region
      %37 = dma.done [#allocation4], 256
    $region17: #{tpu_custom_call.1} parent=1 // pred_fallthru
      _
    %38 = vsyncpa [#allocation3], 1
    %39 = vsyncpa [#allocation4], 1

</llo_original>
